<compile_context>
chip_gen: v7x
topology: tpu7x:2x2x1
jax: 0.10.0
libtpu: 0.0.40
codegen_flags: <defaults>
</compile_context>

<pallas_src>
import math
import functools

import jax
import jax.numpy as jnp
from jax.experimental import pallas as pl
from jax.experimental.pallas import tpu as pltpu

# ---- problem sizes (synthetic, small) ----
B, C, H, W = 2, 4, 16, 16
HW = H * W
Z = 8                       # latent channels
MIN_SIGMA_LATENT = 0.001    # normal_parse_params(latent_params, 0.001)
MIN_SIGMA_REC = 0.01        # GaussianLoss-style rec_log_prob min sigma
LOG_2PI = math.log(2.0 * math.pi)

# cond=[] (unconditional): class_embed / CResBlock conditioning paths are never
# exercised in the reference forward and are not implemented here.
# TODO(synk): cond_method='input'/'resblock' conditioning branches (class_embed,
# CResBlock) and batch_iwae / sampling helpers.


def _softplus(x):
    # softplus via primitives guaranteed to lower on Mosaic (no log1p); used in
    # both the kernel and the pure-JAX reference so they agree to ~f32.
    return jnp.maximum(x, 0.0) + jnp.log(1.0 + jnp.exp(-jnp.abs(x)))


def _vae_kernel(x_ref, eps_ref, ew_ref, gw_ref, gb_ref,
                rec_lp_ref, rec_params_ref, scalars_ref,
                *, beta, batch, z, c, chalf, hw):
    # Single grid step; everything resident in VMEM; batch lives on the lanes.
    x = x_ref[...]        # (cpad, B*HW): rows [0,c) = data, row c = ones (bias fold)
    eps = eps_ref[...]    # (Z, B*HW)
    ew = ew_ref[...]      # (2Z, cpad)   encoder weight, bias folded into column c
    gw = gw_ref[...]      # (2*chalf, Z) generative weight, mu rows [0,c), sigma rows [chalf, chalf+c)
    gb = gb_ref[...]      # (2*chalf, 1)

    # ---- encoder 1x1 conv over batch-merged lanes (bias folded into K) ----
    enc = jnp.dot(ew, x, preferred_element_type=jnp.float32)        # (2Z, B*HW)
    mu = enc[:z]                                                     # tile-aligned split
    sigma = jnp.maximum(_softplus(enc[z:]), MIN_SIGMA_LATENT)

    # ---- reparameterized sample (latent_dist.rsample()) ----
    latent = mu + sigma * eps                                        # (Z, B*HW)

    # ---- generative 1x1 conv (single broadcast+add for the bias) ----
    dec = jnp.dot(gw, latent, preferred_element_type=jnp.float32) + gb   # (2*chalf, B*HW)
    rec_params_ref[...] = dec                # full-tile, 512-lane unmasked store

    # ---- rec_log_prob (per-element Gaussian log prob, reduction='none') ----
    rec_mu = dec[:chalf]                                             # tile-aligned
    rec_sigma = jnp.maximum(_softplus(dec[chalf:]), MIN_SIGMA_REC)   # tile-aligned
    inv_sigma = pl.reciprocal(rec_sigma, approx=True)                # EUP
    inv_sigma = inv_sigma * (2.0 - rec_sigma * inv_sigma)            # one Newton step -> ~f32 exact
    t = (x[:chalf] - rec_mu) * inv_sigma
    lp = -0.5 * t * t - jnp.log(rec_sigma) - 0.5 * LOG_2PI           # (chalf, B*HW)
    rec_lp_ref[...] = lp                     # full-tile store; wrapper keeps rows [0,c)

    # ---- reductions: mask dead rows, then per-batch lane-segment sums ----
    rows = jax.lax.broadcasted_iota(jnp.int32, lp.shape, 0)
    lp_valid = jnp.where(rows < c, lp, 0.0)
    kl_elem = 0.5 * (sigma * sigma + mu * mu - 1.0) - jnp.log(sigma)  # (Z, B*HW)

    lp_rowsum = jnp.sum(lp_valid, axis=0, keepdims=True)             # (1, B*HW)
    kl_rowsum = jnp.sum(kl_elem, axis=0, keepdims=True)               # (1, B*HW)

    # Only the tiny per-batch lane reductions + 128-lane scalar stores are
    # unrolled (segment offsets are static multiples of 128).
    for bi in range(batch):
        lo = bi * hw
        rec_loss_b = jnp.sum(lp_rowsum[:, lo:lo + hw], axis=1, keepdims=True)  # (1,1)
        kl_b = jnp.sum(kl_rowsum[:, lo:lo + hw], axis=1, keepdims=True)        # (1,1)
        vlb_b = rec_loss_b + beta * kl_b       # vlb = rec_loss + beta*kl (spec sign)
        scalars_ref[bi:bi + 1, :] = jnp.broadcast_to(vlb_b, (1, 128))
        scalars_ref[batch + bi:batch + bi + 1, :] = jnp.broadcast_to(kl_b, (1, 128))


def vae_forward(x_nchw, eps_nchw, params, *, beta=1.0, middle_mask=False, metadata=None):
    """Pallas implementation of VAE.forward(x, middle_mask, beta, metadata).

    Params are in PyTorch 1x1-conv layout: ew (2Z, C), eb (2Z,), gw (2C, Z),
    gb (2C,).  middle_mask / metadata accepted for signature parity (cond=[])."""
    del middle_mask, metadata
    ew, eb, gw, gb = params
    b, c, h, w = x_nchw.shape
    hw = h * w
    bhw = b * hw
    z = eps_nchw.shape[1]
    assert hw % 128 == 0, "H*W must be a multiple of 128 for lane-dense tiles"
    assert z % 8 == 0, "latent channels must be a multiple of 8 (sublane tile)"

    f32 = jnp.float32
    chalf = ((c + 7) // 8) * 8                        # sublane-rounded half of the generative head
    cpad = max(chalf, ((c + 1 + 7) // 8) * 8)         # rows of x (data + ones bias row), tile-rounded

    # NCHW -> (C, B*HW): channels on sublanes, batch*spatial merged on lanes.
    x_cm = jnp.transpose(x_nchw.astype(f32), (1, 0, 2, 3)).reshape(c, bhw)
    eps_cm = jnp.transpose(eps_nchw.astype(f32), (1, 0, 2, 3)).reshape(z, bhw)

    # Groundtruth slab padded to a sublane tile; row `c` is all-ones so the
    # encoder bias folds into the matmul contraction.
    pad_rows = jnp.zeros((cpad - c, bhw), f32).at[0, :].set(1.0)
    x_in = jnp.concatenate([x_cm, pad_rows], axis=0)                  # (cpad, B*HW)

    # Encoder weight with the bias folded in as column c.
    ew_aug = jnp.zeros((2 * z, cpad), f32)
    ew_aug = ew_aug.at[:, :c].set(ew.astype(f32))
    ew_aug = ew_aug.at[:, c].set(eb.astype(f32))

    # Generative head padded so mu rows start at 0 and sigma rows start at chalf.
    gw_pad = jnp.zeros((2 * chalf, z), f32)
    gw_pad = gw_pad.at[:c, :].set(gw[:c].astype(f32))
    gw_pad = gw_pad.at[chalf:chalf + c, :].set(gw[c:].astype(f32))
    gb_pad = jnp.zeros((2 * chalf, 1), f32)
    gb_pad = gb_pad.at[:c, 0].set(gb[:c].astype(f32))
    gb_pad = gb_pad.at[chalf:chalf + c, 0].set(gb[c:].astype(f32))

    kernel = functools.partial(_vae_kernel, beta=float(beta), batch=b, z=z,
                               c=c, chalf=chalf, hw=hw)

    out_shapes = (
        jax.ShapeDtypeStruct((chalf, bhw), f32),        # rec_loss_t (row-padded)
        jax.ShapeDtypeStruct((2 * chalf, bhw), f32),    # rec_params (row-padded)
        jax.ShapeDtypeStruct((2 * b, 128), f32),        # [vlb rows | kl rows], lane-dense
    )

    vmem = functools.partial(pl.BlockSpec, memory_space=pltpu.MemorySpace.VMEM)

    rec_lp_pad, rec_params_pad, scalars = pl.pallas_call(
        kernel,
        out_shape=out_shapes,
        in_specs=[vmem() for _ in range(5)],
        out_specs=(vmem(), vmem(), vmem()),
    )(x_in, eps_cm, ew_aug, gw_pad, gb_pad)

    # Wrapper-side reassembly (tiny XLA ops on <40 KB): drop pad rows, go back
    # to NCHW, pull vlb/kl out of the lane-dense scalar slab.
    rec_lp_nchw = rec_lp_pad[:c].reshape(c, b, h, w).transpose(1, 0, 2, 3)
    rec_params_cm = jnp.concatenate(
        [rec_params_pad[:c], rec_params_pad[chalf:chalf + c]], axis=0)
    rec_params_nchw = rec_params_cm.reshape(2 * c, b, h, w).transpose(1, 0, 2, 3)
    vlb = scalars[0:b, 0]
    kl = scalars[b:2 * b, 0]
    return vlb, rec_lp_nchw, kl, rec_params_nchw


def vae_forward_ref(x_nchw, eps_nchw, params, beta=1.0):
    """Pure-JAX reference for correctness checking."""
    ew, eb, gw, gb = params
    b, c, h, w = x_nchw.shape
    z = eps_nchw.shape[1]
    hp = jax.lax.Precision.HIGHEST
    x = x_nchw.reshape(b, c, h * w)
    eps = eps_nchw.reshape(b, z, h * w)
    enc = jnp.einsum('oc,bcs->bos', ew, x, precision=hp) + eb[None, :, None]
    mu, sraw = enc[:, :z], enc[:, z:]
    sigma = jnp.maximum(_softplus(sraw), MIN_SIGMA_LATENT)
    latent = mu + sigma * eps
    dec = jnp.einsum('oz,bzs->bos', gw, latent, precision=hp) + gb[None, :, None]
    rec_mu, rraw = dec[:, :c], dec[:, c:]
    rec_sigma = jnp.maximum(_softplus(rraw), MIN_SIGMA_REC)
    lp = -0.5 * ((x - rec_mu) / rec_sigma) ** 2 - jnp.log(rec_sigma) - 0.5 * LOG_2PI
    rec_loss = lp.sum(axis=(1, 2))
    kl = (0.5 * (sigma ** 2 + mu ** 2 - 1.0) - jnp.log(sigma)).sum(axis=(1, 2))
    vlb = rec_loss + beta * kl
    return vlb, lp.reshape(b, c, h, w), kl, dec.reshape(b, 2 * c, h, w)


if __name__ == "__main__":
    key = jax.random.PRNGKey(0)
    k_x, k_eps, k_ew, k_eb, k_gw, k_gb = jax.random.split(key, 6)

    # Deterministic synthetic inputs / parameters (PyTorch conv weight layout).
    x = jax.random.normal(k_x, (B, C, H, W), jnp.float32)          # batch (NCHW)
    eps = jax.random.normal(k_eps, (B, Z, H, W), jnp.float32)      # rsample noise
    ew = 0.2 * jax.random.normal(k_ew, (2 * Z, C), jnp.float32)    # encoder 1x1 conv (out,in)
    eb = 0.1 * jax.random.normal(k_eb, (2 * Z,), jnp.float32)
    gw = 0.2 * jax.random.normal(k_gw, (2 * C, Z), jnp.float32)    # generative 1x1 conv (out,in)
    gb = 0.1 * jax.random.normal(k_gb, (2 * C,), jnp.float32)
    params = (ew, eb, gw, gb)
    beta = 1.0

    vlb, rec_loss_t, kl, rec_params = vae_forward(x, eps, params, beta=beta)
    jax.block_until_ready((vlb, rec_loss_t, kl, rec_params))

    # Sanity check against pure-JAX reference (tolerance tightened 1e-2 -> 1e-3
    # thanks to the Newton-refined reciprocal; f32 matmuls throughout).
    vlb_r, rec_lp_r, kl_r, rec_params_r = vae_forward_ref(x, eps, params, beta=beta)
    assert vlb.shape == (B,) and kl.shape == (B,)
    assert rec_loss_t.shape == (B, C, H, W)
    assert rec_params.shape == (B, 2 * C, H, W)
    assert jnp.allclose(rec_params, rec_params_r, rtol=1e-3, atol=1e-3)
    assert jnp.allclose(rec_loss_t, rec_lp_r, rtol=1e-3, atol=1e-3)
    assert jnp.allclose(kl, kl_r, rtol=1e-3, atol=1e-3)
    assert jnp.allclose(vlb, vlb_r, rtol=1e-3, atol=1e-3)

    print("KERNEL_OK")
</pallas_src>

<mosaic_0001>
module attributes {stable_mosaic.version = 11 : i64} {
  func.func @_vae_kernel(%arg0: memref<8x512xf32, #tpu.memory_space<vmem>>, %arg1: memref<8x512xf32, #tpu.memory_space<vmem>>, %arg2: memref<16x8xf32, #tpu.memory_space<vmem>>, %arg3: memref<16x8xf32, #tpu.memory_space<vmem>>, %arg4: memref<16x1xf32, #tpu.memory_space<vmem>>, %arg5: memref<8x512xf32, #tpu.memory_space<vmem>>, %arg6: memref<16x512xf32, #tpu.memory_space<vmem>>, %arg7: memref<4x128xf32, #tpu.memory_space<vmem>>) attributes {dimension_semantics = [], scalar_prefetch = 0 : i64, scratch_operands = 0 : i64, tpu.core_type = #tpu.core_type<tc>} {
    %c0 = arith.constant 0 : index
    %c0_0 = arith.constant 0 : index
    %0 = vector.load %arg0[%c0, %c0_0] : memref<8x512xf32, #tpu.memory_space<vmem>>, vector<8x512xf32>
    %c0_1 = arith.constant 0 : index
    %c0_2 = arith.constant 0 : index
    %1 = vector.load %arg1[%c0_1, %c0_2] : memref<8x512xf32, #tpu.memory_space<vmem>>, vector<8x512xf32>
    %c0_3 = arith.constant 0 : index
    %c0_4 = arith.constant 0 : index
    %2 = vector.load %arg2[%c0_3, %c0_4] : memref<16x8xf32, #tpu.memory_space<vmem>>, vector<16x8xf32>
    %c0_5 = arith.constant 0 : index
    %c0_6 = arith.constant 0 : index
    %3 = vector.load %arg3[%c0_5, %c0_6] : memref<16x8xf32, #tpu.memory_space<vmem>>, vector<16x8xf32>
    %c0_7 = arith.constant 0 : index
    %c0_8 = arith.constant 0 : index
    %4 = vector.load %arg4[%c0_7, %c0_8] : memref<16x1xf32, #tpu.memory_space<vmem>>, vector<16x1xf32>
    %cst = arith.constant dense<0.000000e+00> : vector<16x512xf32>
    %5 = tpu.matmul %2, %0, %cst {dimension_numbers = #tpu.dot_dimension_numbers<[1], [0], [0], [1], [0, 0, 1, 1], [], []>} : vector<16x8xf32>, vector<8x512xf32>, vector<16x512xf32> -> vector<16x512xf32>
    %6 = vector.extract_strided_slice %5 {offsets = [0, 0], sizes = [8, 512], strides = [1, 1]} : vector<16x512xf32> to vector<8x512xf32>
    %7 = vector.extract_strided_slice %5 {offsets = [8, 0], sizes = [8, 512], strides = [1, 1]} : vector<16x512xf32> to vector<8x512xf32>
    %cst_9 = arith.constant 0.000000e+00 : f32
    %8 = vector.broadcast %cst_9 : f32 to vector<8x512xf32>
    %9 = arith.maximumf %7, %8 : vector<8x512xf32>
    %10 = math.absf %7 : vector<8x512xf32>
    %cst_10 = arith.constant 0.000000e+00 : f32
    %11 = vector.broadcast %cst_10 : f32 to vector<8x512xf32>
    %12 = arith.subf %11, %10 : vector<8x512xf32>
    %13 = math.exp %12 : vector<8x512xf32>
    %cst_11 = arith.constant 1.000000e+00 : f32
    %14 = vector.broadcast %cst_11 : f32 to vector<8x512xf32>
    %15 = arith.addf %14, %13 : vector<8x512xf32>
    %16 = math.log %15 : vector<8x512xf32>
    %17 = arith.addf %9, %16 : vector<8x512xf32>
    %cst_12 = arith.constant 1.000000e-03 : f32
    %18 = vector.broadcast %cst_12 : f32 to vector<8x512xf32>
    %19 = arith.maximumf %17, %18 : vector<8x512xf32>
    %20 = arith.mulf %19, %1 : vector<8x512xf32>
    %21 = arith.addf %6, %20 : vector<8x512xf32>
    %cst_13 = arith.constant dense<0.000000e+00> : vector<16x512xf32>
    %22 = tpu.matmul %3, %21, %cst_13 {dimension_numbers = #tpu.dot_dimension_numbers<[1], [0], [0], [1], [0, 0, 1, 1], [], []>} : vector<16x8xf32>, vector<8x512xf32>, vector<16x512xf32> -> vector<16x512xf32>
    %23 = vector.broadcast %4 : vector<16x1xf32> to vector<16x512xf32>
    %24 = arith.addf %22, %23 : vector<16x512xf32>
    %c0_14 = arith.constant 0 : index
    %c0_15 = arith.constant 0 : index
    %25 = vector.load %arg6[%c0_14, %c0_15] : memref<16x512xf32, #tpu.memory_space<vmem>>, vector<16x512xf32>
    tpu.vector_store %arg6[%c0_14, %c0_15], %24 {strides = array<i32>} : memref<16x512xf32, #tpu.memory_space<vmem>>, vector<16x512xf32>,
    %26 = vector.extract_strided_slice %24 {offsets = [0, 0], sizes = [8, 512], strides = [1, 1]} : vector<16x512xf32> to vector<8x512xf32>
    %27 = vector.extract_strided_slice %24 {offsets = [8, 0], sizes = [8, 512], strides = [1, 1]} : vector<16x512xf32> to vector<8x512xf32>
    %cst_16 = arith.constant 0.000000e+00 : f32
    %28 = vector.broadcast %cst_16 : f32 to vector<8x512xf32>
    %29 = arith.maximumf %27, %28 : vector<8x512xf32>
    %30 = math.absf %27 : vector<8x512xf32>
    %cst_17 = arith.constant 0.000000e+00 : f32
    %31 = vector.broadcast %cst_17 : f32 to vector<8x512xf32>
    %32 = arith.subf %31, %30 : vector<8x512xf32>
    %33 = math.exp %32 : vector<8x512xf32>
    %cst_18 = arith.constant 1.000000e+00 : f32
    %34 = vector.broadcast %cst_18 : f32 to vector<8x512xf32>
    %35 = arith.addf %34, %33 : vector<8x512xf32>
    %36 = math.log %35 : vector<8x512xf32>
    %37 = arith.addf %29, %36 : vector<8x512xf32>
    %cst_19 = arith.constant 0.00999999977 : f32
    %38 = vector.broadcast %cst_19 : f32 to vector<8x512xf32>
    %39 = arith.maximumf %37, %38 : vector<8x512xf32>
    %40 = tpu.reciprocal %39 {approx = true} : vector<8x512xf32> -> vector<8x512xf32>
    %41 = arith.mulf %39, %40 : vector<8x512xf32>
    %cst_20 = arith.constant 2.000000e+00 : f32
    %42 = vector.broadcast %cst_20 : f32 to vector<8x512xf32>
    %43 = arith.subf %42, %41 : vector<8x512xf32>
    %44 = arith.mulf %40, %43 : vector<8x512xf32>
    %45 = arith.subf %0, %26 : vector<8x512xf32>
    %46 = arith.mulf %45, %44 : vector<8x512xf32>
    %cst_21 = arith.constant -5.000000e-01 : f32
    %47 = vector.broadcast %cst_21 : f32 to vector<8x512xf32>
    %48 = arith.mulf %47, %46 : vector<8x512xf32>
    %49 = arith.mulf %48, %46 : vector<8x512xf32>
    %50 = math.log %39 : vector<8x512xf32>
    %51 = arith.subf %49, %50 : vector<8x512xf32>
    %cst_22 = arith.constant 0.918938517 : f32
    %52 = vector.broadcast %cst_22 : f32 to vector<8x512xf32>
    %53 = arith.subf %51, %52 : vector<8x512xf32>
    %c0_23 = arith.constant 0 : index
    %c0_24 = arith.constant 0 : index
    %54 = vector.load %arg5[%c0_23, %c0_24] : memref<8x512xf32, #tpu.memory_space<vmem>>, vector<8x512xf32>
    tpu.vector_store %arg5[%c0_23, %c0_24], %53 {strides = array<i32>} : memref<8x512xf32, #tpu.memory_space<vmem>>, vector<8x512xf32>,
    %55 = tpu.iota {dimensions = array<i32: 0>} : vector<8x512xi32>
    %c4_i32 = arith.constant 4 : i32
    %56 = vector.broadcast %c4_i32 : i32 to vector<8x512xi32>
    %57 = arith.cmpi slt, %55, %56 : vector<8x512xi32>
    %cst_25 = arith.constant 0.000000e+00 : f32
    %58 = vector.broadcast %cst_25 : f32 to vector<8x512xf32>
    %59 = arith.select %57, %53, %58 : vector<8x512xi1>, vector<8x512xf32>
    %60 = arith.mulf %19, %19 : vector<8x512xf32>
    %61 = arith.mulf %6, %6 : vector<8x512xf32>
    %62 = arith.addf %60, %61 : vector<8x512xf32>
    %cst_26 = arith.constant 1.000000e+00 : f32
    %63 = vector.broadcast %cst_26 : f32 to vector<8x512xf32>
    %64 = arith.subf %62, %63 : vector<8x512xf32>
    %cst_27 = arith.constant 5.000000e-01 : f32
    %65 = vector.broadcast %cst_27 : f32 to vector<8x512xf32>
    %66 = arith.mulf %65, %64 : vector<8x512xf32>
    %67 = math.log %19 : vector<8x512xf32>
    %68 = arith.subf %66, %67 : vector<8x512xf32>
    %cst_28 = arith.constant dense<0.000000e+00> : vector<512xf32>
    %69 = vector.multi_reduction <add>, %59, %cst_28 [0] : vector<8x512xf32> to vector<512xf32>
    %70 = vector.shape_cast %69 : vector<512xf32> to vector<1x512xf32>
    %cst_29 = arith.constant dense<0.000000e+00> : vector<512xf32>
    %71 = vector.multi_reduction <add>, %68, %cst_29 [0] : vector<8x512xf32> to vector<512xf32>
    %72 = vector.shape_cast %71 : vector<512xf32> to vector<1x512xf32>
    %73 = vector.extract_strided_slice %70 {offsets = [0, 0], sizes = [1, 256], strides = [1, 1]} : vector<1x512xf32> to vector<1x256xf32>
    %cst_30 = arith.constant dense<0.000000e+00> : vector<1xf32>
    %74 = vector.multi_reduction <add>, %73, %cst_30 [1] : vector<1x256xf32> to vector<1xf32>
    %75 = vector.shape_cast %74 : vector<1xf32> to vector<1x1xf32>
    %76 = vector.extract_strided_slice %72 {offsets = [0, 0], sizes = [1, 256], strides = [1, 1]} : vector<1x512xf32> to vector<1x256xf32>
    %cst_31 = arith.constant dense<0.000000e+00> : vector<1xf32>
    %77 = vector.multi_reduction <add>, %76, %cst_31 [1] : vector<1x256xf32> to vector<1xf32>
    %78 = vector.shape_cast %77 : vector<1xf32> to vector<1x1xf32>
    %cst_32 = arith.constant 1.000000e+00 : f32
    %79 = vector.broadcast %cst_32 : f32 to vector<1x1xf32>
    %80 = arith.mulf %79, %78 : vector<1x1xf32>
    %81 = arith.addf %75, %80 : vector<1x1xf32>
    %82 = vector.shape_cast %81 : vector<1x1xf32> to vector<1x1xf32>
    %83 = vector.broadcast %82 : vector<1x1xf32> to vector<1x128xf32>
    %c0_33 = arith.constant 0 : index
    %c0_34 = arith.constant 0 : index
    %84 = vector.load %arg7[%c0_33, %c0_34] : memref<4x128xf32, #tpu.memory_space<vmem>>, vector<1x128xf32>
    tpu.vector_store %arg7[%c0_33, %c0_34], %83 {strides = array<i32>} : memref<4x128xf32, #tpu.memory_space<vmem>>, vector<1x128xf32>,
    %85 = vector.shape_cast %78 : vector<1x1xf32> to vector<1x1xf32>
    %86 = vector.broadcast %85 : vector<1x1xf32> to vector<1x128xf32>
    %c2 = arith.constant 2 : index
    %c0_35 = arith.constant 0 : index
    %87 = vector.load %arg7[%c2, %c0_35] : memref<4x128xf32, #tpu.memory_space<vmem>>, vector<1x128xf32>
    tpu.vector_store %arg7[%c2, %c0_35], %86 {strides = array<i32>} : memref<4x128xf32, #tpu.memory_space<vmem>>, vector<1x128xf32>,
    %88 = vector.extract_strided_slice %70 {offsets = [0, 256], sizes = [1, 256], strides = [1, 1]} : vector<1x512xf32> to vector<1x256xf32>
    %cst_36 = arith.constant dense<0.000000e+00> : vector<1xf32>
    %89 = vector.multi_reduction <add>, %88, %cst_36 [1] : vector<1x256xf32> to vector<1xf32>
    %90 = vector.shape_cast %89 : vector<1xf32> to vector<1x1xf32>
    %91 = vector.extract_strided_slice %72 {offsets = [0, 256], sizes = [1, 256], strides = [1, 1]} : vector<1x512xf32> to vector<1x256xf32>
    %cst_37 = arith.constant dense<0.000000e+00> : vector<1xf32>
    %92 = vector.multi_reduction <add>, %91, %cst_37 [1] : vector<1x256xf32> to vector<1xf32>
    %93 = vector.shape_cast %92 : vector<1xf32> to vector<1x1xf32>
    %cst_38 = arith.constant 1.000000e+00 : f32
    %94 = vector.broadcast %cst_38 : f32 to vector<1x1xf32>
    %95 = arith.mulf %94, %93 : vector<1x1xf32>
    %96 = arith.addf %90, %95 : vector<1x1xf32>
    %97 = vector.shape_cast %96 : vector<1x1xf32> to vector<1x1xf32>
    %98 = vector.broadcast %97 : vector<1x1xf32> to vector<1x128xf32>
    %c1 = arith.constant 1 : index
    %c0_39 = arith.constant 0 : index
    %99 = vector.load %arg7[%c1, %c0_39] : memref<4x128xf32, #tpu.memory_space<vmem>>, vector<1x128xf32>
    tpu.vector_store %arg7[%c1, %c0_39], %98 {strides = array<i32>} : memref<4x128xf32, #tpu.memory_space<vmem>>, vector<1x128xf32>,
    %100 = vector.shape_cast %93 : vector<1x1xf32> to vector<1x1xf32>
    %101 = vector.broadcast %100 : vector<1x1xf32> to vector<1x128xf32>
    %c3 = arith.constant 3 : index
    %c0_40 = arith.constant 0 : index
    %102 = vector.load %arg7[%c3, %c0_40] : memref<4x128xf32, #tpu.memory_space<vmem>>, vector<1x128xf32>
    tpu.vector_store %arg7[%c3, %c0_40], %101 {strides = array<i32>} : memref<4x128xf32, #tpu.memory_space<vmem>>, vector<1x128xf32>,
    return
  }
}

</mosaic_0001>

<llo_original>
// kernel: tpu_custom_call.1
$region0: #{tpu_custom_call.1}
  #allocation0 [shape = 'u32[]', space=smem, size = 0x4, offset = 0x4, fixed_abs, tag = 'smem constant byte address 0x4 - core index']
  #allocation1 [shape = 'u32[144,128]{1,0:T(1,128)}', space=vmem, size = 0x12000, scoped, tag = 'internal scratch']
  %s0 = inlined_call_operand.vmem [shape: f32[8,512], index: 0, kind: input, shape index: {}]
  %s1 = inlined_call_operand.vmem [shape: f32[8,512], index: 1, kind: input, shape index: {}]
  %s2 = inlined_call_operand.vmem [shape: f32[16,8], index: 2, kind: input, shape index: {}]
  %s3 = inlined_call_operand.vmem [shape: f32[16,8], index: 3, kind: input, shape index: {}]
  %s4 = inlined_call_operand.vmem [shape: f32[16,1], index: 4, kind: input, shape index: {}]
  %s5 = inlined_call_operand.hbm [shape: f32[8,512], index: 5, kind: output, shape index: {0}]
  %s6 = inlined_call_operand.hbm [shape: f32[16,512], index: 6, kind: output, shape index: {1}]
  %s7 = inlined_call_operand.hbm [shape: f32[4,128], index: 7, kind: output, shape index: {2}]
  %8 = xla_tuple %s5, %s6, %s7
  %s9 = sld [smem:[#allocation0]]
  $region46: #{tpu_custom_call.1} parent=0
    _
  %s11 = ssub.s32 1, %s9
  %s12 = scalar_select 0, %s11, %s9
  $region1: #{tpu_custom_call.1} parent=0
    #allocation2 [shape = 'u8[16384]{0}', space=vmem, size = 0x4000, scoped, tag = 'output window, operand 0, single buffered']
    #allocation3 [shape = 's32[1]{0}', space=sflag, size = 0x4, scoped, tag = 'scoped memory for tpu_custom_call.1']
    #allocation4 [shape = 'u8[32768]{0}', space=vmem, size = 0x8000, scoped, tag = 'output window, operand 1, single buffered']
    #allocation5 [shape = 's32[1]{0}', space=sflag, size = 0x4, scoped, tag = 'scoped memory for tpu_custom_call.1']
    #allocation6 [shape = 'u8[2048]{0}', space=vmem, size = 0x800, scoped, tag = 'output window, operand 2, single buffered']
    %13 = vsyncpa [#allocation3], 0
    %14 = vsyncpa [#allocation5], 0
    // Predicated region
    $region2: #{tpu_custom_call.1} parent=1 // pred_check
      _
    $region3: #{tpu_custom_call.1} parent=1 // pred_check_branch
      %16 = sbr.rel (0) target = $region5
    $region4: #{tpu_custom_call.1} parent=1 // pred_region
      _
    $region5: #{tpu_custom_call.1} parent=1 // pred_fallthru
      _
    // Predicated region
    $region6: #{tpu_custom_call.1} parent=1 // pred_check
      _
    $region7: #{tpu_custom_call.1} parent=1 // pred_check_branch
      %18 = sbr.rel (0) target = $region9
    $region8: #{tpu_custom_call.1} parent=1 // pred_region
      _
    $region9: #{tpu_custom_call.1} parent=1 // pred_fallthru
      _
    // Predicated region
    $region10: #{tpu_custom_call.1} parent=1 // pred_check
      _
    $region11: #{tpu_custom_call.1} parent=1 // pred_check_branch
      %20 = sbr.rel (0) target = $region13
    $region12: #{tpu_custom_call.1} parent=1 // pred_region
      _
    $region13: #{tpu_custom_call.1} parent=1 // pred_fallthru
      _
    // Predicated region
    $region14: #{tpu_custom_call.1} parent=1 // pred_check
      _
    $region15: #{tpu_custom_call.1} parent=1 // pred_check_branch
      %22 = sbr.rel (0) target = $region17
    $region16: #{tpu_custom_call.1} parent=1 // pred_region
      _
    $region17: #{tpu_custom_call.1} parent=1 // pred_fallthru
      _
    // Predicated region
    $region18: #{tpu_custom_call.1} parent=1 // pred_check
      _
    $region19: #{tpu_custom_call.1} parent=1 // pred_check_branch
      %24 = sbr.rel (0) target = $region21
    $region20: #{tpu_custom_call.1} parent=1 // pred_region
      _
    $region21: #{tpu_custom_call.1} parent=1 // pred_fallthru
      _
    %v25 = vld [vmem:[%s0] sm:$0xff]
    %v26 = vld [vmem:[%s0 + $0x8] sm:$0xff]
    %v27 = vld [vmem:[%s0 + $0x10] sm:$0xff]
    %v28 = vld [vmem:[%s0 + $0x18] sm:$0xff]
    %v29 = vld [vmem:[%s1] sm:$0xff]
    %v30 = vld [vmem:[%s1 + $0x8] sm:$0xff]
    %v31 = vld [vmem:[%s1 + $0x10] sm:$0xff]
    %v32 = vld [vmem:[%s1 + $0x18] sm:$0xff]
    %v33 = vld [vmem:[%s2] sm:$0xff]
    %v34 = vld [vmem:[%s2 + $0x8] sm:$0xff]
    %v35 = vld [vmem:[%s3] sm:$0xff]
    %v36 = vld [vmem:[%s3 + $0x8] sm:$0xff]
    %v37 = vld [vmem:[%s4] sm:$0xff]
    %v38 = vld [vmem:[%s4 + $0x8] sm:$0xff]
    %vm39 = vcmask 64512
    %v41 = vsel %vm39, %v33, 0
    %v44 = vsel %vm39, %v34, 0
    %46 = vmatprep.subr.mxu0 %v26
    %47 = vmatpush1.msra.mxu0 %v25
    %48 = vmatprep.subr.mxu0 0.0
    %49 = vmatpush1.msra.mxu0 0.0
    %50 = vmatprep.subr.mxu0 0.0
    %51 = vmatpush1.msra.mxu0 0.0
    %52 = vmatprep.subr.mxu0 0.0
    %53 = vmatpush1.msra.mxu0 0.0
    %54 = vmatprep.subr.mxu0 0.0
    %55 = vmatpush1.msra.mxu0 0.0
    %56 = vmatprep.subr.mxu0 0.0
    %57 = vmatpush1.msra.mxu0 0.0
    %58 = vmatprep.subr.mxu0 0.0
    %59 = vmatpush1.msra.mxu0 0.0
    %60 = vmatprep.subr.mxu0 0.0
    %61 = vmatpush1.msra.mxu0 0.0
    %62 = vmatprep.subr.mxu0 0.0
    %63 = vmatpush1.msra.mxu0 0.0
    %64 = vmatprep.subr.mxu0 0.0
    %65 = vmatpush1.msra.mxu0 0.0
    %66 = vmatprep.subr.mxu0 0.0
    %67 = vmatpush1.msra.mxu0 0.0
    %68 = vmatprep.subr.mxu0 0.0
    %69 = vmatpush1.msra.mxu0 0.0
    %70 = vmatprep.subr.mxu0 0.0
    %71 = vmatpush1.msra.mxu0 0.0
    %72 = vmatprep.subr.mxu0 0.0
    %73 = vmatpush1.msra.mxu0 0.0
    %74 = vmatprep.subr.mxu0 0.0
    %75 = vmatpush1.msra.mxu0 0.0
    %76 = vmatprep.subr.mxu0 0.0
    %77 = vmatpush1.msra.mxu0 0.0
    %78 = vmatprep.subr.mxu0 0.0
    %79 = vmatpush1.msra.mxu0 0.0
    %80 = vmatprep.subr.mxu0 0.0
    %81 = vmatpush1.msra.mxu0 0.0
    %82 = vmatprep.subr.mxu0 0.0
    %83 = vmatpush1.msra.mxu0 0.0
    %84 = vmatprep.subr.mxu0 0.0
    %85 = vmatpush1.msra.mxu0 0.0
    %86 = vmatprep.subr.mxu0 0.0
    %87 = vmatpush1.msra.mxu0 0.0
    %88 = vmatprep.subr.mxu0 0.0
    %89 = vmatpush1.msra.mxu0 0.0
    %90 = vmatprep.subr.mxu0 0.0
    %91 = vmatpush1.msra.mxu0 0.0
    %92 = vmatprep.subr.mxu0 0.0
    %93 = vmatpush1.msra.mxu0 0.0
    %94 = vmatprep.subr.mxu0 0.0
    %95 = vmatpush1.msra.mxu0 0.0
    %96 = vmatprep.subr.mxu0 0.0
    %97 = vmatpush1.msra.mxu0 0.0
    %98 = vmatprep.subr.mxu0 0.0
    %99 = vmatpush1.msra.mxu0 0.0
    %100 = vmatprep.subr.mxu0 0.0
    %101 = vmatpush1.msra.mxu0 0.0
    %102 = vmatprep.subr.mxu0 0.0
    %103 = vmatpush1.msra.mxu0 0.0
    %104 = vmatprep.subr.mxu0 0.0
    %105 = vmatpush1.msra.mxu0 0.0
    %106 = vmatprep.subr.mxu0 0.0
    %107 = vmatpush1.msra.mxu0 0.0
    %108 = vmatprep.subr.mxu0 0.0
    %109 = vmatpush1.msra.mxu0 0.0
    %110 = vmatprep.mubr.f32.mxu0 0.0
    %111 = vmatmul.mubr.f32.gmra.mrb[0].mxu0 %v41
    %v112 = vpop.f32.mrb[0].mxu0
    %v113 = vadd.f32 0.0, %v112
    %v114 = vpop.f32.mrb[0].mxu0
    %v115 = vadd.f32 0.0, %v114
    %116 = vmatprep.mubr.f32.mxu0 0.0
    %117 = vmatmul.mubr.f32.gmra.mrb[0].mxu0 %v44
    %v118 = vpop.f32.mrb[0].mxu0
    %v119 = vadd.f32 0.0, %v118
    %v120 = vpop.f32.mrb[0].mxu0
    %v121 = vadd.f32 0.0, %v120
    %122 = vdwg.mxu0
    %123 = vmatprep.subr.mxu0 %v28
    %124 = vmatpush1.msra.mxu0 %v27
    %125 = vmatprep.subr.mxu0 0.0
    %126 = vmatpush1.msra.mxu0 0.0
    %127 = vmatprep.subr.mxu0 0.0
    %128 = vmatpush1.msra.mxu0 0.0
    %129 = vmatprep.subr.mxu0 0.0
    %130 = vmatpush1.msra.mxu0 0.0
    %131 = vmatprep.subr.mxu0 0.0
    %132 = vmatpush1.msra.mxu0 0.0
    %133 = vmatprep.subr.mxu0 0.0
    %134 = vmatpush1.msra.mxu0 0.0
    %135 = vmatprep.subr.mxu0 0.0
    %136 = vmatpush1.msra.mxu0 0.0
    %137 = vmatprep.subr.mxu0 0.0
    %138 = vmatpush1.msra.mxu0 0.0
    %139 = vmatprep.subr.mxu0 0.0
    %140 = vmatpush1.msra.mxu0 0.0
    %141 = vmatprep.subr.mxu0 0.0
    %142 = vmatpush1.msra.mxu0 0.0
    %143 = vmatprep.subr.mxu0 0.0
    %144 = vmatpush1.msra.mxu0 0.0
    %145 = vmatprep.subr.mxu0 0.0
    %146 = vmatpush1.msra.mxu0 0.0
    %147 = vmatprep.subr.mxu0 0.0
    %148 = vmatpush1.msra.mxu0 0.0
    %149 = vmatprep.subr.mxu0 0.0
    %150 = vmatpush1.msra.mxu0 0.0
    %151 = vmatprep.subr.mxu0 0.0
    %152 = vmatpush1.msra.mxu0 0.0
    %153 = vmatprep.subr.mxu0 0.0
    %154 = vmatpush1.msra.mxu0 0.0
    %155 = vmatprep.subr.mxu0 0.0
    %156 = vmatpush1.msra.mxu0 0.0
    %157 = vmatprep.subr.mxu0 0.0
    %158 = vmatpush1.msra.mxu0 0.0
    %159 = vmatprep.subr.mxu0 0.0
    %160 = vmatpush1.msra.mxu0 0.0
    %161 = vmatprep.subr.mxu0 0.0
    %162 = vmatpush1.msra.mxu0 0.0
    %163 = vmatprep.subr.mxu0 0.0
    %164 = vmatpush1.msra.mxu0 0.0
    %165 = vmatprep.subr.mxu0 0.0
    %166 = vmatpush1.msra.mxu0 0.0
    %167 = vmatprep.subr.mxu0 0.0
    %168 = vmatpush1.msra.mxu0 0.0
    %169 = vmatprep.subr.mxu0 0.0
    %170 = vmatpush1.msra.mxu0 0.0
    %171 = vmatprep.subr.mxu0 0.0
    %172 = vmatpush1.msra.mxu0 0.0
    %173 = vmatprep.subr.mxu0 0.0
    %174 = vmatpush1.msra.mxu0 0.0
    %175 = vmatprep.subr.mxu0 0.0
    %176 = vmatpush1.msra.mxu0 0.0
    %177 = vmatprep.subr.mxu0 0.0
    %178 = vmatpush1.msra.mxu0 0.0
    %179 = vmatprep.subr.mxu0 0.0
    %180 = vmatpush1.msra.mxu0 0.0
    %181 = vmatprep.subr.mxu0 0.0
    %182 = vmatpush1.msra.mxu0 0.0
    %183 = vmatprep.subr.mxu0 0.0
    %184 = vmatpush1.msra.mxu0 0.0
    %185 = vmatprep.subr.mxu0 0.0
    %186 = vmatpush1.msra.mxu0 0.0
    %187 = vmatprep.mubr.f32.mxu0 0.0
    %188 = vmatmul.mubr.f32.gmra.mrb[0].mxu0 %v41
    %v189 = vpop.f32.mrb[0].mxu0
    %v190 = vadd.f32 0.0, %v189
    %v191 = vpop.f32.mrb[0].mxu0
    %v192 = vadd.f32 0.0, %v191
    %193 = vmatprep.mubr.f32.mxu0 0.0
    %194 = vmatmul.mubr.f32.gmra.mrb[0].mxu0 %v44
    %v195 = vpop.f32.mrb[0].mxu0
    %v196 = vadd.f32 0.0, %v195
    %v197 = vpop.f32.mrb[0].mxu0
    %v198 = vadd.f32 0.0, %v197
    %199 = vdwg.mxu0
    %v200 = vmax.f32 %v119, 0.0
    %v201 = vmax.f32 %v121, 0.0
    %v202 = vmax.f32 %v196, 0.0
    %v203 = vmax.f32 %v198, 0.0
    %v204 = vand.u32 2147483647, %v119
    %v205 = vand.u32 2147483647, %v121
    %v206 = vand.u32 2147483647, %v196
    %v207 = vand.u32 2147483647, %v198
    %v208 = vsub.f32 0.0, %v204
    %v209 = vsub.f32 0.0, %v205
    %v210 = vsub.f32 0.0, %v206
    %v211 = vsub.f32 0.0, %v207
    %v212 = vmul.f32 %v208, 1.442695
    %v213 = vpow.pop %v212
    %v214 = vmul.f32 %v209, 1.442695
    %v215 = vpow.pop %v214
    %v216 = vmul.f32 %v210, 1.442695
    %v217 = vpow.pop %v216
    %v218 = vmul.f32 %v211, 1.442695
    %v219 = vpow.pop %v218
    %v220 = vadd.f32 %v213, 1.0
    %v221 = vadd.f32 %v215, 1.0
    %v222 = vadd.f32 %v217, 1.0
    %v223 = vadd.f32 %v219, 1.0
    %v224 = vlog2.pop %v220
    %v225 = vmul.f32 %v224, 0.6931472
    %v226 = vlog2.pop %v221
    %v227 = vmul.f32 %v226, 0.6931472
    %v228 = vlog2.pop %v222
    %v229 = vmul.f32 %v228, 0.6931472
    %v230 = vlog2.pop %v223
    %v231 = vmul.f32 %v230, 0.6931472
    %v232 = vadd.f32 %v200, %v225
    %v233 = vadd.f32 %v201, %v227
    %v234 = vadd.f32 %v202, %v229
    %v235 = vadd.f32 %v203, %v231
    %v236 = vmax.f32 %v232, 0.001
    %v237 = vmax.f32 %v233, 0.001
    %v238 = vmax.f32 %v234, 0.001
    %v239 = vmax.f32 %v235, 0.001
    %v240 = vmul.f32 %v236, %v29
    %v241 = vmul.f32 %v237, %v30
    %v242 = vmul.f32 %v238, %v31
    %v243 = vmul.f32 %v239, %v32
    %v244 = vadd.f32 %v113, %v240
    %v245 = vadd.f32 %v115, %v241
    %v246 = vadd.f32 %v190, %v242
    %v247 = vadd.f32 %v192, %v243
    %249 = vset.pattern.permute.xlu0 0
    %250 = vperm.xlu0 %249, %v37
    %v251 = vpop.permute.xlu0 %250
    %254 = vset.pattern.permute.xlu0 0
    %255 = vperm.xlu0 %254, %v38
    %v256 = vpop.permute.xlu0 %255
    %v259 = vsel %vm39, %v35, 0
    %v262 = vsel %vm39, %v36, 0
    %264 = vmatprep.subr.mxu0 %v245
    %265 = vmatpush1.msra.mxu0 %v244
    %266 = vmatprep.subr.mxu0 0.0
    %267 = vmatpush1.msra.mxu0 0.0
    %268 = vmatprep.subr.mxu0 0.0
    %269 = vmatpush1.msra.mxu0 0.0
    %270 = vmatprep.subr.mxu0 0.0
    %271 = vmatpush1.msra.mxu0 0.0
    %272 = vmatprep.subr.mxu0 0.0
    %273 = vmatpush1.msra.mxu0 0.0
    %274 = vmatprep.subr.mxu0 0.0
    %275 = vmatpush1.msra.mxu0 0.0
    %276 = vmatprep.subr.mxu0 0.0
    %277 = vmatpush1.msra.mxu0 0.0
    %278 = vmatprep.subr.mxu0 0.0
    %279 = vmatpush1.msra.mxu0 0.0
    %280 = vmatprep.subr.mxu0 0.0
    %281 = vmatpush1.msra.mxu0 0.0
    %282 = vmatprep.subr.mxu0 0.0
    %283 = vmatpush1.msra.mxu0 0.0
    %284 = vmatprep.subr.mxu0 0.0
    %285 = vmatpush1.msra.mxu0 0.0
    %286 = vmatprep.subr.mxu0 0.0
    %287 = vmatpush1.msra.mxu0 0.0
    %288 = vmatprep.subr.mxu0 0.0
    %289 = vmatpush1.msra.mxu0 0.0
    %290 = vmatprep.subr.mxu0 0.0
    %291 = vmatpush1.msra.mxu0 0.0
    %292 = vmatprep.subr.mxu0 0.0
    %293 = vmatpush1.msra.mxu0 0.0
    %294 = vmatprep.subr.mxu0 0.0
    %295 = vmatpush1.msra.mxu0 0.0
    %296 = vmatprep.subr.mxu0 0.0
    %297 = vmatpush1.msra.mxu0 0.0
    %298 = vmatprep.subr.mxu0 0.0
    %299 = vmatpush1.msra.mxu0 0.0
    %300 = vmatprep.subr.mxu0 0.0
    %301 = vmatpush1.msra.mxu0 0.0
    %302 = vmatprep.subr.mxu0 0.0
    %303 = vmatpush1.msra.mxu0 0.0
    %304 = vmatprep.subr.mxu0 0.0
    %305 = vmatpush1.msra.mxu0 0.0
    %306 = vmatprep.subr.mxu0 0.0
    %307 = vmatpush1.msra.mxu0 0.0
    %308 = vmatprep.subr.mxu0 0.0
    %309 = vmatpush1.msra.mxu0 0.0
    %310 = vmatprep.subr.mxu0 0.0
    %311 = vmatpush1.msra.mxu0 0.0
    %312 = vmatprep.subr.mxu0 0.0
    %313 = vmatpush1.msra.mxu0 0.0
    %314 = vmatprep.subr.mxu0 0.0
    %315 = vmatpush1.msra.mxu0 0.0
    %316 = vmatprep.subr.mxu0 0.0
    %317 = vmatpush1.msra.mxu0 0.0
    %318 = vmatprep.subr.mxu0 0.0
    %319 = vmatpush1.msra.mxu0 0.0
    %320 = vmatprep.subr.mxu0 0.0
    %321 = vmatpush1.msra.mxu0 0.0
    %322 = vmatprep.subr.mxu0 0.0
    %323 = vmatpush1.msra.mxu0 0.0
    %324 = vmatprep.subr.mxu0 0.0
    %325 = vmatpush1.msra.mxu0 0.0
    %326 = vmatprep.subr.mxu0 0.0
    %327 = vmatpush1.msra.mxu0 0.0
    %328 = vmatprep.mubr.f32.mxu0 0.0
    %329 = vmatmul.mubr.f32.gmra.mrb[0].mxu0 %v259
    %v330 = vpop.f32.mrb[0].mxu0
    %v331 = vadd.f32 %v251, %v330
    %v332 = vpop.f32.mrb[0].mxu0
    %v333 = vadd.f32 %v251, %v332
    %334 = vmatprep.mubr.f32.mxu0 0.0
    %335 = vmatmul.mubr.f32.gmra.mrb[0].mxu0 %v262
    %v336 = vpop.f32.mrb[0].mxu0
    %v337 = vadd.f32 %v256, %v336
    %v338 = vpop.f32.mrb[0].mxu0
    %v339 = vadd.f32 %v256, %v338
    %340 = vdwg.mxu0
    %341 = vmatprep.subr.mxu0 %v247
    %342 = vmatpush1.msra.mxu0 %v246
    %343 = vmatprep.subr.mxu0 0.0
    %344 = vmatpush1.msra.mxu0 0.0
    %345 = vmatprep.subr.mxu0 0.0
    %346 = vmatpush1.msra.mxu0 0.0
    %347 = vmatprep.subr.mxu0 0.0
    %348 = vmatpush1.msra.mxu0 0.0
    %349 = vmatprep.subr.mxu0 0.0
    %350 = vmatpush1.msra.mxu0 0.0
    %351 = vmatprep.subr.mxu0 0.0
    %352 = vmatpush1.msra.mxu0 0.0
    %353 = vmatprep.subr.mxu0 0.0
    %354 = vmatpush1.msra.mxu0 0.0
    %355 = vmatprep.subr.mxu0 0.0
    %356 = vmatpush1.msra.mxu0 0.0
    %357 = vmatprep.subr.mxu0 0.0
    %358 = vmatpush1.msra.mxu0 0.0
    %359 = vmatprep.subr.mxu0 0.0
    %360 = vmatpush1.msra.mxu0 0.0
    %361 = vmatprep.subr.mxu0 0.0
    %362 = vmatpush1.msra.mxu0 0.0
    %363 = vmatprep.subr.mxu0 0.0
    %364 = vmatpush1.msra.mxu0 0.0
    %365 = vmatprep.subr.mxu0 0.0
    %366 = vmatpush1.msra.mxu0 0.0
    %367 = vmatprep.subr.mxu0 0.0
    %368 = vmatpush1.msra.mxu0 0.0
    %369 = vmatprep.subr.mxu0 0.0
    %370 = vmatpush1.msra.mxu0 0.0
    %371 = vmatprep.subr.mxu0 0.0
    %372 = vmatpush1.msra.mxu0 0.0
    %373 = vmatprep.subr.mxu0 0.0
    %374 = vmatpush1.msra.mxu0 0.0
    %375 = vmatprep.subr.mxu0 0.0
    %376 = vmatpush1.msra.mxu0 0.0
    %377 = vmatprep.subr.mxu0 0.0
    %378 = vmatpush1.msra.mxu0 0.0
    %379 = vmatprep.subr.mxu0 0.0
    %380 = vmatpush1.msra.mxu0 0.0
    %381 = vmatprep.subr.mxu0 0.0
    %382 = vmatpush1.msra.mxu0 0.0
    %383 = vmatprep.subr.mxu0 0.0
    %384 = vmatpush1.msra.mxu0 0.0
    %385 = vmatprep.subr.mxu0 0.0
    %386 = vmatpush1.msra.mxu0 0.0
    %387 = vmatprep.subr.mxu0 0.0
    %388 = vmatpush1.msra.mxu0 0.0
    %389 = vmatprep.subr.mxu0 0.0
    %390 = vmatpush1.msra.mxu0 0.0
    %391 = vmatprep.subr.mxu0 0.0
    %392 = vmatpush1.msra.mxu0 0.0
    %393 = vmatprep.subr.mxu0 0.0
    %394 = vmatpush1.msra.mxu0 0.0
    %395 = vmatprep.subr.mxu0 0.0
    %396 = vmatpush1.msra.mxu0 0.0
    %397 = vmatprep.subr.mxu0 0.0
    %398 = vmatpush1.msra.mxu0 0.0
    %399 = vmatprep.subr.mxu0 0.0
    %400 = vmatpush1.msra.mxu0 0.0
    %401 = vmatprep.subr.mxu0 0.0
    %402 = vmatpush1.msra.mxu0 0.0
    %403 = vmatprep.subr.mxu0 0.0
    %404 = vmatpush1.msra.mxu0 0.0
    %405 = vmatprep.mubr.f32.mxu0 0.0
    %406 = vmatmul.mubr.f32.gmra.mrb[0].mxu0 %v259
    %v407 = vpop.f32.mrb[0].mxu0
    %v408 = vadd.f32 %v251, %v407
    %v409 = vpop.f32.mrb[0].mxu0
    %v410 = vadd.f32 %v251, %v409
    %411 = vmatprep.mubr.f32.mxu0 0.0
    %412 = vmatmul.mubr.f32.gmra.mrb[0].mxu0 %v262
    %v413 = vpop.f32.mrb[0].mxu0
    %v414 = vadd.f32 %v256, %v413
    %v415 = vpop.f32.mrb[0].mxu0
    %v416 = vadd.f32 %v256, %v415
    %417 = vdwg.mxu0
    %418 = vst [vmem:[#allocation4] sm:$0xff] %v331
    %419 = vst [vmem:[#allocation4 + $0x8] sm:$0xff] %v333
    %420 = vst [vmem:[#allocation4 + $0x10] sm:$0xff] %v408
    %421 = vst [vmem:[#allocation4 + $0x18] sm:$0xff] %v410
    %422 = vst [vmem:[#allocation4 + $0x20] sm:$0xff] %v337
    %423 = vst [vmem:[#allocation4 + $0x28] sm:$0xff] %v339
    %424 = vst [vmem:[#allocation4 + $0x30] sm:$0xff] %v414
    %425 = vst [vmem:[#allocation4 + $0x38] sm:$0xff] %v416
    %v426 = vmax.f32 %v337, 0.0
    %v427 = vmax.f32 %v339, 0.0
    %v428 = vmax.f32 %v414, 0.0
    %v429 = vmax.f32 %v416, 0.0
    %v430 = vand.u32 2147483647, %v337
    %v431 = vand.u32 2147483647, %v339
    %v432 = vand.u32 2147483647, %v414
    %v433 = vand.u32 2147483647, %v416
    %v434 = vsub.f32 0.0, %v430
    %v435 = vsub.f32 0.0, %v431
    %v436 = vsub.f32 0.0, %v432
    %v437 = vsub.f32 0.0, %v433
    %v438 = vmul.f32 %v434, 1.442695
    %v439 = vpow.pop %v438
    %v440 = vmul.f32 %v435, 1.442695
    %v441 = vpow.pop %v440
    %v442 = vmul.f32 %v436, 1.442695
    %v443 = vpow.pop %v442
    %v444 = vmul.f32 %v437, 1.442695
    %v445 = vpow.pop %v444
    %v446 = vadd.f32 %v439, 1.0
    %v447 = vadd.f32 %v441, 1.0
    %v448 = vadd.f32 %v443, 1.0
    %v449 = vadd.f32 %v445, 1.0
    %v450 = vlog2.pop %v446
    %v451 = vmul.f32 %v450, 0.6931472
    %v452 = vlog2.pop %v447
    %v453 = vmul.f32 %v452, 0.6931472
    %v454 = vlog2.pop %v448
    %v455 = vmul.f32 %v454, 0.6931472
    %v456 = vlog2.pop %v449
    %v457 = vmul.f32 %v456, 0.6931472
    %v458 = vadd.f32 %v426, %v451
    %v459 = vadd.f32 %v427, %v453
    %v460 = vadd.f32 %v428, %v455
    %v461 = vadd.f32 %v429, %v457
    %v462 = vmax.f32 %v458, 0.01
    %v463 = vmax.f32 %v459, 0.01
    %v464 = vmax.f32 %v460, 0.01
    %v465 = vmax.f32 %v461, 0.01
    %v466 = vrcp.pop %v462
    %v467 = vrcp.pop %v463
    %v468 = vrcp.pop %v464
    %v469 = vrcp.pop %v465
    %v470 = vmul.f32 %v462, %v466
    %v471 = vmul.f32 %v463, %v467
    %v472 = vmul.f32 %v464, %v468
    %v473 = vmul.f32 %v465, %v469
    %v474 = vsub.f32 2.0, %v470
    %v475 = vsub.f32 2.0, %v471
    %v476 = vsub.f32 2.0, %v472
    %v477 = vsub.f32 2.0, %v473
    %v478 = vmul.f32 %v466, %v474
    %v479 = vmul.f32 %v467, %v475
    %v480 = vmul.f32 %v468, %v476
    %v481 = vmul.f32 %v469, %v477
    %v482 = vsub.f32 %v25, %v331
    %v483 = vsub.f32 %v26, %v333
    %v484 = vsub.f32 %v27, %v408
    %v485 = vsub.f32 %v28, %v410
    %v486 = vmul.f32 %v482, %v478
    %v487 = vmul.f32 %v483, %v479
    %v488 = vmul.f32 %v484, %v480
    %v489 = vmul.f32 %v485, %v481
    %v490 = vmul.f32 %v486, -0.5
    %v491 = vmul.f32 %v487, -0.5
    %v492 = vmul.f32 %v488, -0.5
    %v493 = vmul.f32 %v489, -0.5
    %v494 = vmul.f32 %v490, %v486
    %v495 = vmul.f32 %v491, %v487
    %v496 = vmul.f32 %v492, %v488
    %v497 = vmul.f32 %v493, %v489
    %v498 = vlog2.pop %v462
    %v499 = vmul.f32 %v498, 0.6931472
    %v500 = vlog2.pop %v463
    %v501 = vmul.f32 %v500, 0.6931472
    %v502 = vlog2.pop %v464
    %v503 = vmul.f32 %v502, 0.6931472
    %v504 = vlog2.pop %v465
    %v505 = vmul.f32 %v504, 0.6931472
    %v506 = vsub.f32 %v494, %v499
    %v507 = vsub.f32 %v495, %v501
    %v508 = vsub.f32 %v496, %v503
    %v509 = vsub.f32 %v497, %v505
    %v510 = vsub.f32 %v506, 0.9189385
    %v511 = vsub.f32 %v507, 0.9189385
    %v512 = vsub.f32 %v508, 0.9189385
    %v513 = vsub.f32 %v509, 0.9189385
    %514 = vst [vmem:[#allocation2] sm:$0xff] %v510
    %515 = vst [vmem:[#allocation2 + $0x8] sm:$0xff] %v511
    %516 = vst [vmem:[#allocation2 + $0x10] sm:$0xff] %v512
    %517 = vst [vmem:[#allocation2 + $0x18] sm:$0xff] %v513
    %v518 = vlaneseq
    %v519 = vshrl.u32 %v518, 7
    %vm520 = vcmp.lt.s32.totalorder %v519, 4
    %v521 = vsel %vm520, %v510, 0.0
    %v522 = vsel %vm520, %v511, 0.0
    %v523 = vsel %vm520, %v512, 0.0
    %v524 = vsel %vm520, %v513, 0.0
    %v525 = vmul.f32 %v236, %v236
    %v526 = vmul.f32 %v237, %v237
    %v527 = vmul.f32 %v238, %v238
    %v528 = vmul.f32 %v239, %v239
    %v529 = vmul.f32 %v113, %v113
    %v530 = vmul.f32 %v115, %v115
    %v531 = vmul.f32 %v190, %v190
    %v532 = vmul.f32 %v192, %v192
    %v533 = vadd.f32 %v525, %v529
    %v534 = vadd.f32 %v526, %v530
    %v535 = vadd.f32 %v527, %v531
    %v536 = vadd.f32 %v528, %v532
    %v537 = vsub.f32 %v533, 1.0
    %v538 = vsub.f32 %v534, 1.0
    %v539 = vsub.f32 %v535, 1.0
    %v540 = vsub.f32 %v536, 1.0
    %v541 = vmul.f32 %v537, 0.5
    %v542 = vmul.f32 %v538, 0.5
    %v543 = vmul.f32 %v539, 0.5
    %v544 = vmul.f32 %v540, 0.5
    %v545 = vlog2.pop %v236
    %v546 = vmul.f32 %v545, 0.6931472
    %v547 = vlog2.pop %v237
    %v548 = vmul.f32 %v547, 0.6931472
    %v549 = vlog2.pop %v238
    %v550 = vmul.f32 %v549, 0.6931472
    %v551 = vlog2.pop %v239
    %v552 = vmul.f32 %v551, 0.6931472
    %v553 = vsub.f32 %v541, %v546
    %v554 = vsub.f32 %v542, %v548
    %v555 = vsub.f32 %v543, %v550
    %v556 = vsub.f32 %v544, %v552
    %v557 = vrot.slane %v521, 4
    %v558 = vadd.f32 %v521, %v557
    %v559 = vrot.slane %v558, 2
    %v560 = vadd.f32 %v558, %v559
    %v561 = vrot.slane %v560, 1
    %v562 = vadd.f32 %v560, %v561
    %v563 = vrot.slane %v522, 4
    %v564 = vadd.f32 %v522, %v563
    %v565 = vrot.slane %v564, 2
    %v566 = vadd.f32 %v564, %v565
    %v567 = vrot.slane %v566, 1
    %v568 = vadd.f32 %v566, %v567
    %v569 = vrot.slane %v523, 4
    %v570 = vadd.f32 %v523, %v569
    %v571 = vrot.slane %v570, 2
    %v572 = vadd.f32 %v570, %v571
    %v573 = vrot.slane %v572, 1
    %v574 = vadd.f32 %v572, %v573
    %v575 = vrot.slane %v524, 4
    %v576 = vadd.f32 %v524, %v575
    %v577 = vrot.slane %v576, 2
    %v578 = vadd.f32 %v576, %v577
    %v579 = vrot.slane %v578, 1
    %v580 = vadd.f32 %v578, %v579
    %v581 = vrot.slane %v553, 4
    %v582 = vadd.f32 %v553, %v581
    %v583 = vrot.slane %v582, 2
    %v584 = vadd.f32 %v582, %v583
    %v585 = vrot.slane %v584, 1
    %v586 = vadd.f32 %v584, %v585
    %v587 = vrot.slane %v554, 4
    %v588 = vadd.f32 %v554, %v587
    %v589 = vrot.slane %v588, 2
    %v590 = vadd.f32 %v588, %v589
    %v591 = vrot.slane %v590, 1
    %v592 = vadd.f32 %v590, %v591
    %v593 = vrot.slane %v555, 4
    %v594 = vadd.f32 %v555, %v593
    %v595 = vrot.slane %v594, 2
    %v596 = vadd.f32 %v594, %v595
    %v597 = vrot.slane %v596, 1
    %v598 = vadd.f32 %v596, %v597
    %v599 = vrot.slane %v556, 4
    %v600 = vadd.f32 %v556, %v599
    %v601 = vrot.slane %v600, 2
    %v602 = vadd.f32 %v600, %v601
    %v603 = vrot.slane %v602, 1
    %v604 = vadd.f32 %v602, %v603
    %v605 = vadd.f32 %v562, %v568
    %606 = vadd.xlane.f32.xlu0 %v605
    %v607 = vpop.xlane.xlu0 %606
    %v608 = vadd.f32 %v586, %v592
    %609 = vadd.xlane.f32.xlu0 %v608
    %v610 = vpop.xlane.xlu0 %609
    %v611 = vadd.f32 %v607, %v610
    %612 = vst [vmem:[#allocation6] sm:$0x1] %v611
    %613 = vst [vmem:[#allocation6 + $0x2] sm:$0x1] %v610
    %v614 = vadd.f32 %v574, %v580
    %615 = vadd.xlane.f32.xlu0 %v614
    %v616 = vpop.xlane.xlu0 %615
    %v617 = vadd.f32 %v598, %v604
    %618 = vadd.xlane.f32.xlu0 %v617
    %v619 = vpop.xlane.xlu0 %618
    %v620 = vadd.f32 %v616, %v619
    %621 = vst [vmem:[#allocation6 + $0x1] sm:$0x1] %v620
    %622 = vst [vmem:[#allocation6 + $0x3] sm:$0x1] %v619
    // Predicated region
    $region22: #{tpu_custom_call.1} parent=1 // pred_check
      _
    $region23: #{tpu_custom_call.1} parent=1 // pred_check_branch
      %624 = sbr.rel (0) target = $region25
    $region24: #{tpu_custom_call.1} parent=1 // pred_region
      %s626 = ssub.s32 512, 512
      %627 = vsyncadd [#allocation3], %s626
      %s629 = sshll.u32 [#allocation2], 4
      %s630 = int_to_ptr.vmem [resolvable:$true] %s629
      %632 = dma.vmem_to_hbm [thread:$0]  %s630, 512, %s5, [#allocation3]
    $region25: #{tpu_custom_call.1} parent=1 // pred_fallthru
      _
    // Predicated region
    $region26: #{tpu_custom_call.1} parent=1 // pred_check
      _
    $region27: #{tpu_custom_call.1} parent=1 // pred_check_branch
      %634 = sbr.rel (0) target = $region29
    $region28: #{tpu_custom_call.1} parent=1 // pred_region
      %s636 = ssub.s32 1024, 1024
      %637 = vsyncadd [#allocation5], %s636
      %s638 = sshll.u32 [#allocation4], 4
      %s639 = int_to_ptr.vmem [resolvable:$true] %s638
      %644 = dma.vmem_to_hbm [thread:$0]  %s639, 1024, %s6, [#allocation5], 512, 512, 32
    $region29: #{tpu_custom_call.1} parent=1 // pred_fallthru
      _
    // Predicated region
    $region30: #{tpu_custom_call.1} parent=1 // pred_check
      _
    $region31: #{tpu_custom_call.1} parent=1 // pred_check_branch
      %646 = sbr.rel (0) target = $region33
    $region32: #{tpu_custom_call.1} parent=1 // pred_region
      %s648 = ssub.s32 64, 64
      %649 = vsyncadd [#allocation5], %s648
      %s651 = sshll.u32 [#allocation6], 4
      %s652 = int_to_ptr.vmem [resolvable:$true] %s651
      %654 = dma.vmem_to_hbm [thread:$0]  %s652, 64, %s7, [#allocation5]
    $region33: #{tpu_custom_call.1} parent=1 // pred_fallthru
      _
    // Predicated region
    $region34: #{tpu_custom_call.1} parent=1 // pred_check
      _
    $region35: #{tpu_custom_call.1} parent=1 // pred_check_branch
      %656 = sbr.rel (0) target = $region37
    $region36: #{tpu_custom_call.1} parent=1 // pred_region
      %657 = dma.done [#allocation3], 512
    $region37: #{tpu_custom_call.1} parent=1 // pred_fallthru
      _
    // Predicated region
    $region38: #{tpu_custom_call.1} parent=1 // pred_check
      _
    $region39: #{tpu_custom_call.1} parent=1 // pred_check_branch
      %659 = sbr.rel (0) target = $region41
    $region40: #{tpu_custom_call.1} parent=1 // pred_region
      %660 = dma.done [#allocation5], 1024
    $region41: #{tpu_custom_call.1} parent=1 // pred_fallthru
      _
    // Predicated region
    $region42: #{tpu_custom_call.1} parent=1 // pred_check
      _
    $region43: #{tpu_custom_call.1} parent=1 // pred_check_branch
      %662 = sbr.rel (0) target = $region45
    $region44: #{tpu_custom_call.1} parent=1 // pred_region
      %663 = dma.done [#allocation5], 64
    $region45: #{tpu_custom_call.1} parent=1 // pred_fallthru
      _
    %664 = vsyncpa [#allocation3], 1
    %665 = vsyncpa [#allocation5], 1

</llo_original>
